<compile_context>
chip_gen: v7x
topology: tpu7x:2x2x1
jax: 0.10.0
libtpu: 0.0.40
codegen_flags: <defaults>
</compile_context>

<pallas_src>
import functools

import jax
import jax.numpy as jnp
from jax import lax
from jax.experimental import pallas as pl
from jax.experimental.pallas import tpu as pltpu


def _mean_shift_kernel(c0_ref, xaug_ref, xsq_ref,
                       c_out_ref, diff_out_ref, steps_out_ref,
                       c_scratch, diff_scratch,
                       *, chan, neg_inv_bw, eps, max_steps):
    # Loop-invariant data: resident in VMEM for the whole convergence loop.
    Xa = xaug_ref[...]                   # [N, chan+1] f32, last column == 1
    X = Xa[:, :chan]                     # [N, chan]
    xsq = xsq_ref[...]                   # [1, N]  precomputed ||x_n||^2

    c_scratch[...] = c0_ref[...]         # C (seeds), updated in place

    def cond(carry):
        diff, step = carry
        return jnp.logical_and(diff > eps, step <= max_steps)

    def body(carry):
        _, step = carry
        C = c_scratch[...]               # [S, chan]

        # Pairwise squared distance via the MXU:
        #   dist[s, n] = ||C_s||^2 + ||x_n||^2 - 2 * C_s . x_n
        cx = lax.dot_general(C, X, (((1,), (1,)), ((), ())),
                             preferred_element_type=jnp.float32)   # [S, N]
        csq = jnp.sum(C * C, axis=1, keepdims=True)                # [S, 1]
        dist = csq + xsq - 2.0 * cx                                # [S, N]

        # Gaussian kernel weights; bandwidth folded into one multiply.
        w = jnp.exp(dist * neg_inv_bw)                             # [S, N]

        # num and denom in a single MXU matmul: [w @ X | w @ 1].
        nd = jnp.dot(w, Xa, preferred_element_type=jnp.float32)    # [S, chan+1]
        denom = jnp.maximum(nd[:, chan:chan + 1], 1e-20)           # [S, 1]
        C_new = nd[:, :chan] * pl.reciprocal(denom, approx=False)  # [S, chan]

        c_scratch[...] = C_new

        # diff = max over seeds of L1(C_old - C_new) (matches torch reference).
        d = jnp.sum(jnp.abs(C - C_new), axis=1, keepdims=True)     # [S, 1]
        diff_scratch[...] = jnp.max(d, axis=0, keepdims=True)      # [1, 1]
        return diff_scratch[0, 0], step + 1

    diff_f, steps_f = lax.while_loop(
        cond, body, (jnp.float32(10.0), jnp.int32(0)))

    c_out_ref[...] = c_scratch[...]
    diff_out_ref[0] = diff_f
    steps_out_ref[0] = steps_f


def mean_shift_forward(C0, X_flat, *, bandwidth, eps=0.01, max_steps=1000):
    """Fused MeanShift.forward(): iterate to convergence inside one kernel.

    C0: [S, chan] seeds, X_flat: [N, chan] points.
    Returns (C_final [S, chan], diff scalar, steps scalar).
    """
    S, chan = C0.shape
    N = X_flat.shape[0]

    X_flat = X_flat.astype(jnp.float32)
    X_aug = jnp.concatenate([X_flat, jnp.ones((N, 1), jnp.float32)], axis=1)
    xsq = jnp.sum(X_flat * X_flat, axis=1)[None, :]                # [1, N]

    kernel = functools.partial(
        _mean_shift_kernel,
        chan=int(chan),
        neg_inv_bw=float(-1.0 / bandwidth),   # NOTE: baked constant -> retrace per bandwidth
        eps=float(eps),
        max_steps=int(max_steps))

    c_final, diff, steps = pl.pallas_call(
        kernel,
        in_specs=[
            pl.BlockSpec(memory_space=pltpu.MemorySpace.VMEM),      # C0
            pl.BlockSpec(memory_space=pltpu.MemorySpace.VMEM),      # X_aug
            pl.BlockSpec(memory_space=pltpu.MemorySpace.VMEM),      # ||x||^2
        ],
        out_specs=(
            pl.BlockSpec(memory_space=pltpu.MemorySpace.VMEM),      # C_final
            pl.BlockSpec(memory_space=pltpu.MemorySpace.SMEM),      # diff (scalar)
            pl.BlockSpec(memory_space=pltpu.MemorySpace.SMEM),      # steps (scalar)
        ),
        out_shape=(
            jax.ShapeDtypeStruct((S, chan), jnp.float32),
            jax.ShapeDtypeStruct((1,), jnp.float32),
            jax.ShapeDtypeStruct((1,), jnp.int32),
        ),
        scratch_shapes=[
            pltpu.VMEM((S, chan), jnp.float32),   # current C
            pltpu.VMEM((1, 1), jnp.float32),      # diff staging (scalar readback)
        ],
    )(C0.astype(jnp.float32), X_aug, xsq)

    return c_final, diff[0], steps[0]


if __name__ == "__main__":
    key = jax.random.PRNGKey(0)
    k_data, k_perm = jax.random.split(key)

    chan, H, W = 4, 16, 16
    n_seeds = 8
    bandwidth = 2.0
    eps = 0.01
    max_steps = 1000

    # "The data to cluster" (e.g. a [chan, H, W] embedding map).
    x = jax.random.normal(k_data, (chan, H, W), dtype=jnp.float32)

    # ---- __init__ glue in plain JAX (host side; data-dependent shapes) ----
    X_flat = x.reshape(chan, -1).T                       # [N, chan]
    keep = jnp.sum(X_flat, axis=1) != 0                  # drop zero-sum points
    X_flat = X_flat[keep]
    if X_flat.shape[0] == 0:
        raise ValueError("Empty tensor provided. Change seed, try again!")
    perm = jax.random.permutation(k_perm, X_flat.shape[0])
    C0 = X_flat[perm[:n_seeds]]                          # [n_seeds, chan]

    # ---- fused Pallas kernel ----
    run = jax.jit(functools.partial(mean_shift_forward, bandwidth=bandwidth,
                                    eps=eps, max_steps=max_steps))
    c_final, diff, steps = run(C0, X_flat)
    jax.block_until_ready(c_final)

    # ---- plain-JAX reference of MeanShift.forward (eager Python loop) ----
    c_ref = C0
    d_ref = 10.0
    step_ref = 0
    while d_ref > eps:
        c_old = c_ref
        dist = jnp.sum((c_ref[:, :, None] - X_flat.T[None, :, :]) ** 2 / bandwidth,
                       axis=1)
        w = jnp.exp(-dist)
        c_ref = (w @ X_flat) / jnp.sum(w, axis=1, keepdims=True)
        d_ref = float(jnp.max(jnp.sum(jnp.abs(c_old - c_ref), axis=1)))
        step_ref += 1
        if step_ref > max_steps:
            break

    assert c_final.shape == (n_seeds, chan)
    assert float(diff) <= eps or int(steps) > max_steps, "kernel did not converge"
    # Loose tolerance: stopping-step can differ by at most one near the eps
    # threshold (last update <= eps per seed).
    assert jnp.allclose(c_final, c_ref, rtol=1e-3, atol=5e-2), \
        "mean-shift kernel mismatch vs plain-JAX reference"

    print("KERNEL_OK")
</pallas_src>

<mosaic_0001>
module attributes {stable_mosaic.version = 11 : i64} {
  func.func @_mean_shift_kernel(%arg0: memref<8x4xf32, #tpu.memory_space<vmem>>, %arg1: memref<256x5xf32, #tpu.memory_space<vmem>>, %arg2: memref<1x256xf32, #tpu.memory_space<vmem>>, %arg3: memref<8x4xf32, #tpu.memory_space<vmem>>, %arg4: memref<1xf32, #tpu.memory_space<smem>>, %arg5: memref<1xi32, #tpu.memory_space<smem>>, %arg6: memref<8x4xf32, #tpu.memory_space<vmem>>, %arg7: memref<1x1xf32, #tpu.memory_space<vmem>>) attributes {dimension_semantics = [], scalar_prefetch = 0 : i64, scratch_operands = 2 : i64, tpu.core_type = #tpu.core_type<tc>} {
    %c0 = arith.constant 0 : index
    %c0_0 = arith.constant 0 : index
    %0 = vector.load %arg1[%c0, %c0_0] : memref<256x5xf32, #tpu.memory_space<vmem>>, vector<256x5xf32>
    %1 = vector.extract_strided_slice %0 {offsets = [0, 0], sizes = [256, 4], strides = [1, 1]} : vector<256x5xf32> to vector<256x4xf32>
    %c0_1 = arith.constant 0 : index
    %c0_2 = arith.constant 0 : index
    %2 = vector.load %arg2[%c0_1, %c0_2] : memref<1x256xf32, #tpu.memory_space<vmem>>, vector<1x256xf32>
    %c0_3 = arith.constant 0 : index
    %c0_4 = arith.constant 0 : index
    %3 = vector.load %arg0[%c0_3, %c0_4] : memref<8x4xf32, #tpu.memory_space<vmem>>, vector<8x4xf32>
    %c0_5 = arith.constant 0 : index
    %c0_6 = arith.constant 0 : index
    %4 = vector.load %arg6[%c0_5, %c0_6] : memref<8x4xf32, #tpu.memory_space<vmem>>, vector<8x4xf32>
    tpu.vector_store %arg6[%c0_5, %c0_6], %3 {strides = array<i32>} : memref<8x4xf32, #tpu.memory_space<vmem>>, vector<8x4xf32>,
    %cst = arith.constant 1.000000e+01 : f32
    %c0_i32 = arith.constant 0 : i32
    %5:2 = scf.while (%arg8 = %cst, %arg9 = %c0_i32) : (f32, i32) -> (f32, i32) {
      %cst_13 = arith.constant 0.00999999977 : f32
      %10 = arith.cmpf ogt, %arg8, %cst_13 : f32
      %c1000_i32 = arith.constant 1000 : i32
      %11 = arith.cmpi sle, %arg9, %c1000_i32 : i32
      %12 = arith.andi %10, %11 : i1
      scf.condition(%12) %arg8, %arg9 : f32, i32
    } do {
    ^bb0(%arg8: f32, %arg9: i32):
      %c0_13 = arith.constant 0 : index
      %c0_14 = arith.constant 0 : index
      %10 = vector.load %arg6[%c0_13, %c0_14] : memref<8x4xf32, #tpu.memory_space<vmem>>, vector<8x4xf32>
      %cst_15 = arith.constant dense<0.000000e+00> : vector<8x256xf32>
      %11 = tpu.matmul %10, %1, %cst_15 {dimension_numbers = #tpu.dot_dimension_numbers<[1], [1], [0], [0], [0, 0, 1, 0], [], []>} : vector<8x4xf32>, vector<256x4xf32>, vector<8x256xf32> -> vector<8x256xf32>
      %12 = arith.mulf %10, %10 : vector<8x4xf32>
      %cst_16 = arith.constant dense<0.000000e+00> : vector<8xf32>
      %13 = vector.multi_reduction <add>, %12, %cst_16 [1] : vector<8x4xf32> to vector<8xf32>
      %14 = vector.shape_cast %13 : vector<8xf32> to vector<8x1xf32>
      %15 = vector.broadcast %14 : vector<8x1xf32> to vector<8x256xf32>
      %16 = vector.broadcast %2 : vector<1x256xf32> to vector<8x256xf32>
      %17 = arith.addf %15, %16 : vector<8x256xf32>
      %cst_17 = arith.constant 2.000000e+00 : f32
      %18 = vector.broadcast %cst_17 : f32 to vector<8x256xf32>
      %19 = arith.mulf %18, %11 : vector<8x256xf32>
      %20 = arith.subf %17, %19 : vector<8x256xf32>
      %cst_18 = arith.constant -5.000000e-01 : f32
      %21 = vector.broadcast %cst_18 : f32 to vector<8x256xf32>
      %22 = arith.mulf %20, %21 : vector<8x256xf32>
      %23 = math.exp %22 : vector<8x256xf32>
      %cst_19 = arith.constant dense<0.000000e+00> : vector<8x5xf32>
      %24 = tpu.matmul %23, %0, %cst_19 {dimension_numbers = #tpu.dot_dimension_numbers<[1], [0], [0], [1], [0, 0, 1, 1], [], []>} : vector<8x256xf32>, vector<256x5xf32>, vector<8x5xf32> -> vector<8x5xf32>
      %25 = vector.extract_strided_slice %24 {offsets = [0, 4], sizes = [8, 1], strides = [1, 1]} : vector<8x5xf32> to vector<8x1xf32>
      %cst_20 = arith.constant 9.99999968E-21 : f32
      %26 = vector.broadcast %cst_20 : f32 to vector<8x1xf32>
      %27 = arith.maximumf %25, %26 : vector<8x1xf32>
      %28 = vector.extract_strided_slice %24 {offsets = [0, 0], sizes = [8, 4], strides = [1, 1]} : vector<8x5xf32> to vector<8x4xf32>
      %29 = tpu.reciprocal %27 : vector<8x1xf32> -> vector<8x1xf32>
      %30 = vector.broadcast %29 : vector<8x1xf32> to vector<8x4xf32>
      %31 = arith.mulf %28, %30 : vector<8x4xf32>
      %c0_21 = arith.constant 0 : index
      %c0_22 = arith.constant 0 : index
      %32 = vector.load %arg6[%c0_21, %c0_22] : memref<8x4xf32, #tpu.memory_space<vmem>>, vector<8x4xf32>
      tpu.vector_store %arg6[%c0_21, %c0_22], %31 {strides = array<i32>} : memref<8x4xf32, #tpu.memory_space<vmem>>, vector<8x4xf32>,
      %33 = arith.subf %10, %31 : vector<8x4xf32>
      %34 = math.absf %33 : vector<8x4xf32>
      %cst_23 = arith.constant dense<0.000000e+00> : vector<8xf32>
      %35 = vector.multi_reduction <add>, %34, %cst_23 [1] : vector<8x4xf32> to vector<8xf32>
      %36 = vector.shape_cast %35 : vector<8xf32> to vector<8x1xf32>
      %cst_24 = arith.constant dense<0xFF800000> : vector<1xf32>
      %37 = vector.multi_reduction <maximumf>, %36, %cst_24 [0] : vector<8x1xf32> to vector<1xf32>
      %38 = vector.shape_cast %37 : vector<1xf32> to vector<1x1xf32>
      %c0_25 = arith.constant 0 : index
      %c0_26 = arith.constant 0 : index
      %39 = vector.load %arg7[%c0_25, %c0_26] : memref<1x1xf32, #tpu.memory_space<vmem>>, vector<1x1xf32>
      tpu.vector_store %arg7[%c0_25, %c0_26], %38 {strides = array<i32>} : memref<1x1xf32, #tpu.memory_space<vmem>>, vector<1x1xf32>,
      %c0_27 = arith.constant 0 : index
      %c0_28 = arith.constant 0 : index
      %40 = vector.load %arg7[%c0_27, %c0_28] : memref<1x1xf32, #tpu.memory_space<vmem>>, vector<1x1xf32>
      %41 = vector.extract %40[0, 0] : f32 from vector<1x1xf32>
      %c1_i32 = arith.constant 1 : i32
      %42 = arith.addi %arg9, %c1_i32 : i32
      scf.yield %41, %42 : f32, i32
    }
    %c0_7 = arith.constant 0 : index
    %c0_8 = arith.constant 0 : index
    %6 = vector.load %arg6[%c0_7, %c0_8] : memref<8x4xf32, #tpu.memory_space<vmem>>, vector<8x4xf32>
    %c0_9 = arith.constant 0 : index
    %c0_10 = arith.constant 0 : index
    %7 = vector.load %arg3[%c0_9, %c0_10] : memref<8x4xf32, #tpu.memory_space<vmem>>, vector<8x4xf32>
    tpu.vector_store %arg3[%c0_9, %c0_10], %6 {strides = array<i32>} : memref<8x4xf32, #tpu.memory_space<vmem>>, vector<8x4xf32>,
    %c0_11 = arith.constant 0 : index
    %8 = memref.load %arg4[%c0_11] : memref<1xf32, #tpu.memory_space<smem>>
    memref.store %5#0, %arg4[%c0_11] : memref<1xf32, #tpu.memory_space<smem>>
    %c0_12 = arith.constant 0 : index
    %9 = memref.load %arg5[%c0_12] : memref<1xi32, #tpu.memory_space<smem>>
    memref.store %5#1, %arg5[%c0_12] : memref<1xi32, #tpu.memory_space<smem>>
    return
  }
}

</mosaic_0001>

<llo_original>
// kernel: mean_shift_forward.1
$region0: #{mean_shift_forward.1}
  #allocation0 [shape = 'u32[]', space=smem, size = 0x4, offset = 0x4, fixed_abs, tag = 'smem constant byte address 0x4 - core index']
  #allocation1 [shape = 'u32[144,128]{1,0:T(1,128)}', space=vmem, size = 0x12000, scoped, tag = 'internal scratch']
  #allocation2 [shape = 'f32[8,4]{1,0:T(8,128)}', space=vmem, size = 0x1000, scoped, tag = 'scratch operand']
  #allocation3 [shape = 'f32[1,1]{1,0:T(1,128)}', space=vmem, size = 0x200, scoped, tag = 'scratch operand']
  %s0 = inlined_call_operand.vmem [shape: f32[8,4], index: 0, kind: input, shape index: {}]
  %s1 = inlined_call_operand.vmem [shape: f32[256,5], index: 1, kind: input, shape index: {}]
  %s2 = inlined_call_operand.vmem [shape: f32[1,256], index: 2, kind: input, shape index: {}]
  %s3 = inlined_call_operand.vmem [shape: f32[8,4], index: 3, kind: output, shape index: {0}]
  %s4 = inlined_call_operand.hbm [shape: f32[1], index: 4, kind: output, shape index: {1}]
  %s5 = inlined_call_operand.hbm [shape: s32[1], index: 5, kind: output, shape index: {2}]
  %6 = xla_tuple %s3, %s4, %s5
  %s7 = sld [smem:[#allocation0]]
  $region45: #{mean_shift_forward.1} parent=0
    _
  %s9 = ssub.s32 1, %s7
  %s10 = scalar_select 0, %s9, %s7
  $region1: #{mean_shift_forward.1} parent=0
    #allocation4 [shape = 'u8[512]{0}', space=smem, size = 0x200, scoped, tag = 'output window, operand 1, single buffered']
    #allocation5 [shape = 's32[1]{0}', space=sflag, size = 0x4, scoped, tag = 'scoped memory for mean_shift_forward.1']
    #allocation6 [shape = 'u8[512]{0}', space=smem, size = 0x200, scoped, tag = 'output window, operand 2, single buffered']
    #allocation7 [shape = 's32[1]{0}', space=sflag, size = 0x4, scoped, tag = 'scoped memory for mean_shift_forward.1']
    %11 = vsyncpa [#allocation5], 0
    %12 = vsyncpa [#allocation7], 0
    // Predicated region
    $region2: #{mean_shift_forward.1} parent=1 // pred_check
      _
    $region3: #{mean_shift_forward.1} parent=1 // pred_check_branch
      %14 = sbr.rel (0) target = $region5
    $region4: #{mean_shift_forward.1} parent=1 // pred_region
      _
    $region5: #{mean_shift_forward.1} parent=1 // pred_fallthru
      _
    // Predicated region
    $region6: #{mean_shift_forward.1} parent=1 // pred_check
      _
    $region7: #{mean_shift_forward.1} parent=1 // pred_check_branch
      %16 = sbr.rel (0) target = $region9
    $region8: #{mean_shift_forward.1} parent=1 // pred_region
      _
    $region9: #{mean_shift_forward.1} parent=1 // pred_fallthru
      _
    // Predicated region
    $region10: #{mean_shift_forward.1} parent=1 // pred_check
      _
    $region11: #{mean_shift_forward.1} parent=1 // pred_check_branch
      %18 = sbr.rel (0) target = $region13
    $region12: #{mean_shift_forward.1} parent=1 // pred_region
      _
    $region13: #{mean_shift_forward.1} parent=1 // pred_fallthru
      _
    %v19 = vld [vmem:[%s1] sm:$0xff]
    %v20 = vld [vmem:[%s1 + $0x8] sm:$0xff]
    %v21 = vld [vmem:[%s1 + $0x10] sm:$0xff]
    %v22 = vld [vmem:[%s1 + $0x18] sm:$0xff]
    %v23 = vld [vmem:[%s1 + $0x20] sm:$0xff]
    %v24 = vld [vmem:[%s1 + $0x28] sm:$0xff]
    %v25 = vld [vmem:[%s1 + $0x30] sm:$0xff]
    %v26 = vld [vmem:[%s1 + $0x38] sm:$0xff]
    %v27 = vld [vmem:[%s1 + $0x40] sm:$0xff]
    %v28 = vld [vmem:[%s1 + $0x48] sm:$0xff]
    %v29 = vld [vmem:[%s1 + $0x50] sm:$0xff]
    %v30 = vld [vmem:[%s1 + $0x58] sm:$0xff]
    %v31 = vld [vmem:[%s1 + $0x60] sm:$0xff]
    %v32 = vld [vmem:[%s1 + $0x68] sm:$0xff]
    %v33 = vld [vmem:[%s1 + $0x70] sm:$0xff]
    %v34 = vld [vmem:[%s1 + $0x78] sm:$0xff]
    %v35 = vld [vmem:[%s1 + $0x80] sm:$0xff]
    %v36 = vld [vmem:[%s1 + $0x88] sm:$0xff]
    %v37 = vld [vmem:[%s1 + $0x90] sm:$0xff]
    %v38 = vld [vmem:[%s1 + $0x98] sm:$0xff]
    %v39 = vld [vmem:[%s1 + $0xa0] sm:$0xff]
    %v40 = vld [vmem:[%s1 + $0xa8] sm:$0xff]
    %v41 = vld [vmem:[%s1 + $0xb0] sm:$0xff]
    %v42 = vld [vmem:[%s1 + $0xb8] sm:$0xff]
    %v43 = vld [vmem:[%s1 + $0xc0] sm:$0xff]
    %v44 = vld [vmem:[%s1 + $0xc8] sm:$0xff]
    %v45 = vld [vmem:[%s1 + $0xd0] sm:$0xff]
    %v46 = vld [vmem:[%s1 + $0xd8] sm:$0xff]
    %v47 = vld [vmem:[%s1 + $0xe0] sm:$0xff]
    %v48 = vld [vmem:[%s1 + $0xe8] sm:$0xff]
    %v49 = vld [vmem:[%s1 + $0xf0] sm:$0xff]
    %v50 = vld [vmem:[%s1 + $0xf8] sm:$0xff]
    %v51 = vld [vmem:[%s2] sm:$0x3]
    %v52 = vld [vmem:[%s0] sm:$0xff]
    %vm53 = vcmask 31744
    %54 = vst.msk [vmem:[#allocation2] sm:$0xff] %vm53, %v52
    // While loop
    $region14: #{mean_shift_forward.1} parent=1 // loop_pre_header
      _
    $region15: #{mean_shift_forward.1} parent=1 // loop_header
      %s56 = sphi 10.0, %s355
      %s57 = sphi 0, %s356
      %p58 = scmp.gt.f32.partialorder %s56, 0.01
      %p59 = scmp.le.s32.totalorder %s57, 1000
      %p60 = pnand %p58, %p59
      %p61 = pneg %p60
    $region16: #{mean_shift_forward.1} parent=1 // loop_header_branch
      %63 = sbr.rel (%p60) target = $region20
    $region17: #{mean_shift_forward.1} parent=1 // loop_body
      %v64 = vld [vmem:[#allocation2] sm:$0xff]
      %v66 = vsel %vm53, %v64, 0
      %v69 = vsel %vm53, %v19, 0
      %v72 = vsel %vm53, %v20, 0
      %v75 = vsel %vm53, %v21, 0
      %v78 = vsel %vm53, %v22, 0
      %v81 = vsel %vm53, %v23, 0
      %v84 = vsel %vm53, %v24, 0
      %v87 = vsel %vm53, %v25, 0
      %v90 = vsel %vm53, %v26, 0
      %v93 = vsel %vm53, %v27, 0
      %v96 = vsel %vm53, %v28, 0
      %v99 = vsel %vm53, %v29, 0
      %v102 = vsel %vm53, %v30, 0
      %v105 = vsel %vm53, %v31, 0
      %v108 = vsel %vm53, %v32, 0
      %v111 = vsel %vm53, %v33, 0
      %v114 = vsel %vm53, %v34, 0
      %v117 = vsel %vm53, %v35, 0
      %v120 = vsel %vm53, %v36, 0
      %v123 = vsel %vm53, %v37, 0
      %v126 = vsel %vm53, %v38, 0
      %v129 = vsel %vm53, %v39, 0
      %v132 = vsel %vm53, %v40, 0
      %v135 = vsel %vm53, %v41, 0
      %v138 = vsel %vm53, %v42, 0
      %v141 = vsel %vm53, %v43, 0
      %v144 = vsel %vm53, %v44, 0
      %v147 = vsel %vm53, %v45, 0
      %v150 = vsel %vm53, %v46, 0
      %v153 = vsel %vm53, %v47, 0
      %v156 = vsel %vm53, %v48, 0
      %v159 = vsel %vm53, %v49, 0
      %v162 = vsel %vm53, %v50, 0
      %164 = vmatprep.subr.mxu0 0.0
      %165 = vmatpush1.xpose.msra.mxu0 %v69
      %166 = vmatprep.subr.mxu0 0.0
      %167 = vmatpush1.xpose.msra.mxu0 %v72
      %168 = vmatprep.subr.mxu0 0.0
      %169 = vmatpush1.xpose.msra.mxu0 %v75
      %170 = vmatprep.subr.mxu0 0.0
      %171 = vmatpush1.xpose.msra.mxu0 %v78
      %172 = vmatprep.subr.mxu0 0.0
      %173 = vmatpush1.xpose.msra.mxu0 %v81
      %174 = vmatprep.subr.mxu0 0.0
      %175 = vmatpush1.xpose.msra.mxu0 %v84
      %176 = vmatprep.subr.mxu0 0.0
      %177 = vmatpush1.xpose.msra.mxu0 %v87
      %178 = vmatprep.subr.mxu0 0.0
      %179 = vmatpush1.xpose.msra.mxu0 %v90
      %180 = vmatprep.subr.mxu0 0.0
      %181 = vmatpush1.xpose.msra.mxu0 %v93
      %182 = vmatprep.subr.mxu0 0.0
      %183 = vmatpush1.xpose.msra.mxu0 %v96
      %184 = vmatprep.subr.mxu0 0.0
      %185 = vmatpush1.xpose.msra.mxu0 %v99
      %186 = vmatprep.subr.mxu0 0.0
      %187 = vmatpush1.xpose.msra.mxu0 %v102
      %188 = vmatprep.subr.mxu0 0.0
      %189 = vmatpush1.xpose.msra.mxu0 %v105
      %190 = vmatprep.subr.mxu0 0.0
      %191 = vmatpush1.xpose.msra.mxu0 %v108
      %192 = vmatprep.subr.mxu0 0.0
      %193 = vmatpush1.xpose.msra.mxu0 %v111
      %194 = vmatprep.subr.mxu0 0.0
      %195 = vmatpush1.xpose.msra.mxu0 %v114
      %196 = vmatprep.subr.mxu0 0.0
      %197 = vmatpush1.xpose.msra.mxu0 %v117
      %198 = vmatprep.subr.mxu0 0.0
      %199 = vmatpush1.xpose.msra.mxu0 %v120
      %200 = vmatprep.subr.mxu0 0.0
      %201 = vmatpush1.xpose.msra.mxu0 %v123
      %202 = vmatprep.subr.mxu0 0.0
      %203 = vmatpush1.xpose.msra.mxu0 %v126
      %204 = vmatprep.subr.mxu0 0.0
      %205 = vmatpush1.xpose.msra.mxu0 %v129
      %206 = vmatprep.subr.mxu0 0.0
      %207 = vmatpush1.xpose.msra.mxu0 %v132
      %208 = vmatprep.subr.mxu0 0.0
      %209 = vmatpush1.xpose.msra.mxu0 %v135
      %210 = vmatprep.subr.mxu0 0.0
      %211 = vmatpush1.xpose.msra.mxu0 %v138
      %212 = vmatprep.subr.mxu0 0.0
      %213 = vmatpush1.xpose.msra.mxu0 %v141
      %214 = vmatprep.subr.mxu0 0.0
      %215 = vmatpush1.xpose.msra.mxu0 %v144
      %216 = vmatprep.subr.mxu0 0.0
      %217 = vmatpush1.xpose.msra.mxu0 %v147
      %218 = vmatprep.subr.mxu0 0.0
      %219 = vmatpush1.xpose.msra.mxu0 %v150
      %220 = vmatprep.subr.mxu0 0.0
      %221 = vmatpush1.xpose.msra.mxu0 %v153
      %222 = vmatprep.subr.mxu0 0.0
      %223 = vmatpush1.xpose.msra.mxu0 %v156
      %224 = vmatprep.subr.mxu0 0.0
      %225 = vmatpush1.xpose.msra.mxu0 %v159
      %226 = vmatprep.subr.mxu0 0.0
      %227 = vmatpush1.xpose.msra.mxu0 %v162
      %228 = vmatprep.mubr.f32.mxu0 0.0
      %229 = vmatmul.mubr.f32.gmra.mrb[0].mxu0 %v66
      %v230 = vpop.f32.mrb[0].mxu0
      %v231 = vadd.f32 0.0, %v230
      %v232 = vpop.f32.mrb[0].mxu0
      %v233 = vadd.f32 0.0, %v232
      %234 = vdwg.mxu0
      %v235 = vmul.f32 %v64, %v64
      %v236 = vsel %vm53, %v235, 0.0
      %237 = vadd.xlane.f32.xlu0 %v236
      %v238 = vpop.xlane.xlu0 %237
      %v240 = vlaneseq
      %v241 = vshrl.u32 %v240, 7
      %v242 = vsub.s32 0, %v241
      %v243 = vrot.slane %v51, %v242
      %v244 = vlaneseq
      %v245 = vshrl.u32 %v244, 7
      %v246 = vsub.s32 1, %v245
      %v247 = vrot.slane %v51, %v246
      %v250 = vadd.f32 %v238, %v243
      %v251 = vadd.f32 %v238, %v247
      %v252 = vmul.f32 %v231, 2.0
      %v253 = vmul.f32 %v233, 2.0
      %v254 = vsub.f32 %v250, %v252
      %v255 = vsub.f32 %v251, %v253
      %v256 = vmul.f32 %v254, -0.5
      %v257 = vmul.f32 %v255, -0.5
      %v258 = vmul.f32 %v256, 1.442695
      %v259 = vpow.pop %v258
      %v260 = vmul.f32 %v257, 1.442695
      %v261 = vpow.pop %v260
      %262 = vmatprep.subr.mxu0 0.0
      %263 = vmatpush1.msra.mxu0 %v19
      %264 = vmatprep.subr.mxu0 0.0
      %265 = vmatpush1.msra.mxu0 %v20
      %266 = vmatprep.subr.mxu0 0.0
      %267 = vmatpush1.msra.mxu0 %v21
      %268 = vmatprep.subr.mxu0 0.0
      %269 = vmatpush1.msra.mxu0 %v22
      %270 = vmatprep.subr.mxu0 0.0
      %271 = vmatpush1.msra.mxu0 %v23
      %272 = vmatprep.subr.mxu0 0.0
      %273 = vmatpush1.msra.mxu0 %v24
      %274 = vmatprep.subr.mxu0 0.0
      %275 = vmatpush1.msra.mxu0 %v25
      %276 = vmatprep.subr.mxu0 0.0
      %277 = vmatpush1.msra.mxu0 %v26
      %278 = vmatprep.subr.mxu0 0.0
      %279 = vmatpush1.msra.mxu0 %v27
      %280 = vmatprep.subr.mxu0 0.0
      %281 = vmatpush1.msra.mxu0 %v28
      %282 = vmatprep.subr.mxu0 0.0
      %283 = vmatpush1.msra.mxu0 %v29
      %284 = vmatprep.subr.mxu0 0.0
      %285 = vmatpush1.msra.mxu0 %v30
      %286 = vmatprep.subr.mxu0 0.0
      %287 = vmatpush1.msra.mxu0 %v31
      %288 = vmatprep.subr.mxu0 0.0
      %289 = vmatpush1.msra.mxu0 %v32
      %290 = vmatprep.subr.mxu0 0.0
      %291 = vmatpush1.msra.mxu0 %v33
      %292 = vmatprep.subr.mxu0 0.0
      %293 = vmatpush1.msra.mxu0 %v34
      %294 = vmatprep.subr.mxu0 0.0
      %295 = vmatpush1.msra.mxu0 %v35
      %296 = vmatprep.subr.mxu0 0.0
      %297 = vmatpush1.msra.mxu0 %v36
      %298 = vmatprep.subr.mxu0 0.0
      %299 = vmatpush1.msra.mxu0 %v37
      %300 = vmatprep.subr.mxu0 0.0
      %301 = vmatpush1.msra.mxu0 %v38
      %302 = vmatprep.subr.mxu0 0.0
      %303 = vmatpush1.msra.mxu0 %v39
      %304 = vmatprep.subr.mxu0 0.0
      %305 = vmatpush1.msra.mxu0 %v40
      %306 = vmatprep.subr.mxu0 0.0
      %307 = vmatpush1.msra.mxu0 %v41
      %308 = vmatprep.subr.mxu0 0.0
      %309 = vmatpush1.msra.mxu0 %v42
      %310 = vmatprep.subr.mxu0 0.0
      %311 = vmatpush1.msra.mxu0 %v43
      %312 = vmatprep.subr.mxu0 0.0
      %313 = vmatpush1.msra.mxu0 %v44
      %314 = vmatprep.subr.mxu0 0.0
      %315 = vmatpush1.msra.mxu0 %v45
      %316 = vmatprep.subr.mxu0 0.0
      %317 = vmatpush1.msra.mxu0 %v46
      %318 = vmatprep.subr.mxu0 0.0
      %319 = vmatpush1.msra.mxu0 %v47
      %320 = vmatprep.subr.mxu0 0.0
      %321 = vmatpush1.msra.mxu0 %v48
      %322 = vmatprep.subr.mxu0 0.0
      %323 = vmatpush1.msra.mxu0 %v49
      %324 = vmatprep.subr.mxu0 0.0
      %325 = vmatpush1.msra.mxu0 %v50
      %326 = vmatprep.mubr.f32.mxu0 %v261
      %327 = vmatmul.mubr.f32.gmra.mrb[0].mxu0 %v259
      %v328 = vpop.f32.mrb[0].mxu0
      %v329 = vadd.f32 0.0, %v328
      %v330 = vpop.f32.mrb[0].mxu0
      %331 = vdwg.mxu0
      %v332 = vmax.f32 %v329, 1e-20
      %v333 = vrcp.pop %v332
      %335 = vset.pattern.permute.xlu0 4
      %336 = vperm.xlu0 %335, %v333
      %v337 = vpop.permute.xlu0 %336
      %v339 = vmul.f32 %v329, %v337
      %340 = vst.msk [vmem:[#allocation2] sm:$0xff] %vm53, %v339
      %v341 = vsub.f32 %v64, %v339
      %v342 = vand.u32 2147483647, %v341
      %v343 = vsel %vm53, %v342, 0.0
      %344 = vadd.xlane.f32.xlu0 %v343
      %v345 = vpop.xlane.xlu0 %344
      %v346 = vrot.slane %v345, 4
      %v347 = vmax.f32 %v345, %v346
      %v348 = vrot.slane %v347, 2
      %v349 = vmax.f32 %v347, %v348
      %v350 = vrot.slane %v349, 1
      %v351 = vmax.f32 %v349, %v350
      %vm352 = vcmask 0
      %353 = vst.msk [vmem:[#allocation3] sm:$0x1] %vm352, %v351
      %v354 = vld [vmem:[#allocation3] sm:$0x1]
      %s355 = vtos %v354
      %s356 = sadd.s32 %s57, 1
    $region18: #{mean_shift_forward.1} parent=1 // loop_footer
      _
    $region19: #{mean_shift_forward.1} parent=1 // loop_footer_branch
      %55 = sbr.rel target = $region15
    $region20: #{mean_shift_forward.1} parent=1 // loop_exit
      _
    %v357 = vld [vmem:[#allocation2] sm:$0xff]
    %358 = vst.msk [vmem:[%s3] sm:$0xff] %vm53, %v357
    %s359 = scalar_lea.smem [#allocation4], 0
    %360 = sst [smem:[%s359]] %s56
    %s361 = scalar_lea.smem [#allocation6], 0
    %362 = sst [smem:[%s361]] %s57
    // Predicated region
    $region21: #{mean_shift_forward.1} parent=1 // pred_check
      _
    $region22: #{mean_shift_forward.1} parent=1 // pred_check_branch
      %364 = sbr.rel (0) target = $region24
    $region23: #{mean_shift_forward.1} parent=1 // pred_region
      _
    $region24: #{mean_shift_forward.1} parent=1 // pred_fallthru
      _
    // Predicated region
    $region25: #{mean_shift_forward.1} parent=1 // pred_check
      _
    $region26: #{mean_shift_forward.1} parent=1 // pred_check_branch
      %366 = sbr.rel (0) target = $region28
    $region27: #{mean_shift_forward.1} parent=1 // pred_region
      %s368 = ssub.s32 16, 16
      %369 = vsyncadd [#allocation5], %s368
      %372 = dma.smem_to_hbm [#allocation4], 16, %s4, [#allocation5]
    $region28: #{mean_shift_forward.1} parent=1 // pred_fallthru
      _
    // Predicated region
    $region29: #{mean_shift_forward.1} parent=1 // pred_check
      _
    $region30: #{mean_shift_forward.1} parent=1 // pred_check_branch
      %374 = sbr.rel (0) target = $region32
    $region31: #{mean_shift_forward.1} parent=1 // pred_region
      %s376 = ssub.s32 16, 16
      %377 = vsyncadd [#allocation7], %s376
      %380 = dma.smem_to_hbm [#allocation6], 16, %s5, [#allocation7]
    $region32: #{mean_shift_forward.1} parent=1 // pred_fallthru
      _
    // Predicated region
    $region33: #{mean_shift_forward.1} parent=1 // pred_check
      _
    $region34: #{mean_shift_forward.1} parent=1 // pred_check_branch
      %382 = sbr.rel (0) target = $region36
    $region35: #{mean_shift_forward.1} parent=1 // pred_region
      _
    $region36: #{mean_shift_forward.1} parent=1 // pred_fallthru
      _
    // Predicated region
    $region37: #{mean_shift_forward.1} parent=1 // pred_check
      _
    $region38: #{mean_shift_forward.1} parent=1 // pred_check_branch
      %384 = sbr.rel (0) target = $region40
    $region39: #{mean_shift_forward.1} parent=1 // pred_region
      %385 = dma.done [#allocation5], 16
    $region40: #{mean_shift_forward.1} parent=1 // pred_fallthru
      _
    // Predicated region
    $region41: #{mean_shift_forward.1} parent=1 // pred_check
      _
    $region42: #{mean_shift_forward.1} parent=1 // pred_check_branch
      %387 = sbr.rel (0) target = $region44
    $region43: #{mean_shift_forward.1} parent=1 // pred_region
      %388 = dma.done [#allocation7], 16
    $region44: #{mean_shift_forward.1} parent=1 // pred_fallthru
      _
    %389 = sfence
    %390 = vsyncpa [#allocation5], 1
    %391 = vsyncpa [#allocation7], 1

</llo_original>
